<compile_context>
chip_gen: v7x
topology: tpu7x:2x2x1
jax: 0.10.0
libtpu: 0.0.40
codegen_flags: <defaults>
</compile_context>

<pallas_src>
import math
import numpy as np
import jax
import jax.numpy as jnp
from jax.experimental import pallas as pl
from jax.experimental.pallas import tpu as pltpu


# ----------------- host-side operator construction (numpy, one-time) -----------------

def _upsample_matrix_1d(n):
    """(2n, n) 1-D bilinear 2x upsample matrix, align_corners=False:  out = U @ in."""
    u = np.zeros((2 * n, n), np.float32)
    for o in range(2 * n):
        src = (o + 0.5) / 2.0 - 0.5
        i0 = int(np.floor(src))
        frac = src - i0
        lo = min(max(i0, 0), n - 1)
        hi = min(max(i0 + 1, 0), n - 1)
        u[o, lo] += 1.0 - frac
        u[o, hi] += frac
    return u


def _upsample_op(n):
    """(n*n, 4*n*n) operator: x_flat(row-major) @ op = bilinear-2x-upsampled flat plane."""
    u1 = _upsample_matrix_1d(n)
    return np.kron(u1, u1).T.astype(np.float32)


def _block_diag(a, k):
    r, c = a.shape
    out = np.zeros((k * r, k * c), a.dtype)
    for b in range(k):
        out[b * r:(b + 1) * r, b * c:(b + 1) * c] = a
    return out


def _probe_roll_sign():
    """pltpu.roll is documented to match np.roll (out[i] = x[i - shift]).  Probe once at
    build time so an opposite rotate convention cannot silently flip the 3x3 tap offsets."""
    def k(x_ref, o_ref):
        o_ref[...] = pltpu.roll(x_ref[...], 1, 1)
    x = jnp.tile(jnp.arange(128, dtype=jnp.float32)[None, :], (8, 1))
    r = np.asarray(pl.pallas_call(
        k, out_shape=jax.ShapeDtypeStruct((8, 128), jnp.float32))(x))
    if float(r[0, 1]) == 0.0:        # np.roll convention
        return 1
    assert float(r[0, 1]) == 2.0, "unexpected pltpu.roll semantics"
    return -1                        # opposite convention


# ------------------------------ fused MultiDecoder kernel ----------------------------------

def build_multi_decoder(max_dim, min_dim, base_hw, batch):
    depths = int(round(math.log2(max_dim / min_dim)))
    roll_sign = _probe_roll_sign()

    # Static per-branch block structure: branch j applies (depths - j) UpBlocks.
    branches = []
    for j in range(depths):
        dim = max_dim // (2 ** j)
        hw = base_hw // (2 ** (depths - j))
        blocks = []
        for _ in range(depths - j):
            blocks.append(dict(cin=dim, cout=dim // 2, hw_in=hw))
            dim //= 2
            hw *= 2
        branches.append(blocks)

    # Block-diagonal (batch folded into lanes) bilinear-2x operators, bf16 (exact values).
    sizes = sorted({blk["hw_in"] for blocks in branches for blk in blocks})
    size_idx = {s: i for i, s in enumerate(sizes)}
    u_ops = [jnp.asarray(_block_diag(_upsample_op(s), batch), jnp.bfloat16) for s in sizes]

    # Packed parameter slab layout: one 8-row-aligned stripe per block,
    # columns = [w_flat (cout, 9cin) | bias | gamma | beta].
    ncol = max(9 * blk["cin"] for blocks in branches for blk in blocks) + 3
    row = 0
    for blocks in branches:
        for blk in blocks:
            blk["row0"] = row
            row += -(-blk["cout"] // 8) * 8
    nrow = row

    max_k = max(9 * blk["cin"] for blocks in branches for blk in blocks)
    max_l = max(batch * (2 * blk["hw_in"]) ** 2 for blocks in branches for blk in blocks)

    n_inputs = depths + 1
    n_uops = len(sizes)
    out_c = min_dim * (depths + 1)
    out_l = batch * base_hw * base_hw

    # -------- static cost estimate (feedback: let XLA overlap this tiny custom call) ----
    flops, trans = 0, 0
    for blocks in branches:
        for blk in blocks:
            pin = batch * blk["hw_in"] ** 2
            L = 4 * pin
            flops += 2 * blk["cin"] * pin * L                 # upsample matmul
            flops += 2 * blk["cout"] * 9 * blk["cin"] * L     # conv (im2col) matmul
            trans += blk["cout"] * (L + 1)                    # erf per element + rsqrt
    act_in = (sum(blocks[0]["cin"] * blocks[0]["hw_in"] ** 2 for blocks in branches)
              + min_dim * base_hw ** 2)
    bytes_accessed = (4 * batch * act_in
                      + sum(int(op.size) * 2 for op in u_ops)
                      + nrow * ncol * 4
                      + out_c * out_l * 4)
    cost = pl.CostEstimate(flops=int(flops), transcendentals=int(trans),
                           bytes_accessed=int(bytes_accessed))

    # ------------------------------------ kernel ---------------------------------------
    def kernel(*refs):
        x_refs = refs[:n_inputs]
        u_refs = refs[n_inputs:n_inputs + n_uops]
        p_ref = refs[n_inputs + n_uops]
        o_ref = refs[n_inputs + n_uops + 1]
        patch_ref = refs[-1]                                   # VMEM scratch (max_k, max_l)

        def up_block(x, blk):
            cin, cout, hw_in = blk["cin"], blk["cout"], blk["hw_in"]
            m = 2 * hw_in
            q = m * m
            L = batch * q
            # (1) bilinear 2x upsample: ONE lane-dense matmul with the block-diagonal
            #     (batch*pin, batch*q) operator; bf16 operator values are exact.
            u_op = u_refs[size_idx[hw_in]][...].astype(jnp.float32)
            u = jnp.dot(x, u_op, preferred_element_type=jnp.float32)   # (cin, batch*q)
            # (2) zero-pad 3x3 im2col taps = XLU lane rolls of u + iota boundary masks,
            #     written straight into VMEM scratch at sublane offset t*cin
            #     (8-aligned, unmasked stores; no 9-tap register list -> no spills).
            lane = jax.lax.broadcasted_iota(jnp.int32, (1, L), 1)
            px = lane % m
            py = (lane % q) // m
            for t in range(9):
                dy, dx = t // 3 - 1, t % 3 - 1
                off = dy * m + dx
                tap = u if off == 0 else pltpu.roll(u, (roll_sign * (-off)) % L, 1)
                valid = ((px + dx >= 0) & (px + dx < m) &
                         (py + dy >= 0) & (py + dy < m))
                patch_ref[t * cin:(t + 1) * cin, :L] = jnp.where(valid, tap, 0.0)
            # (3) conv3x3 as ONE im2col matmul (cout,9cin) x (9cin, batch*q); batch lives
            #     in the lane axis so no per-batch weight broadcast / batched einsum.
            r0, c0 = blk["row0"], 9 * cin
            w = p_ref[r0:r0 + cout, :c0]
            b = p_ref[r0:r0 + cout, c0:c0 + 1]
            g = p_ref[r0:r0 + cout, c0 + 1:c0 + 2]
            bt = p_ref[r0:r0 + cout, c0 + 2:c0 + 3]
            y = jnp.dot(w, patch_ref[:9 * cin, :L],
                        preferred_element_type=jnp.float32) + b
            # (4) BatchNorm2d (training-mode biased stats over N,H,W == the lane axis),
            #     single-pass sum / sum-of-squares lane reductions, eps = 1e-5.
            inv_cnt = 1.0 / L
            mean = jnp.sum(y, axis=1, keepdims=True) * inv_cnt
            var = jnp.sum(y * y, axis=1, keepdims=True) * inv_cnt - mean * mean
            y = (y - mean) * (jax.lax.rsqrt(var + 1e-5) * g) + bt
            # (5) exact (erf) GELU
            return 0.5 * y * (1.0 + jax.lax.erf(y * 0.7071067811865476))

        ys = []
        for j, blocks in enumerate(branches):
            x = x_refs[j][...]
            for blk in blocks:
                x = up_block(x, blk)
            ys.append(x)
        ys.append(x_refs[n_inputs - 1][...])                   # passthrough input
        # channel concat assembled in registers -> ONE unmasked lane-dense store
        o_ref[...] = jnp.concatenate(ys, axis=0)

    # ----------------------------- wrapper-side packing --------------------------------
    def pack_params(params):
        slab = jnp.zeros((nrow, ncol), jnp.float32)
        for j, blocks in enumerate(branches):
            for bi, blk in enumerate(blocks):
                prm = params[j][bi]
                cin, cout = blk["cin"], blk["cout"]
                # HWIO (3,3,cin,cout) -> (cout, 9*cin), column order t*cin + ci
                w_flat = jnp.transpose(prm["w"].reshape(9, cin, cout),
                                       (2, 0, 1)).reshape(cout, 9 * cin)
                block_slab = jnp.concatenate(
                    [w_flat, prm["b"][:, None], prm["gamma"][:, None],
                     prm["beta"][:, None]], axis=1)
                slab = jax.lax.dynamic_update_slice(slab, block_slab, (blk["row0"], 0))
        return slab

    def forward(inputs_nchw, params):
        n = inputs_nchw[0].shape[0]
        assert n == batch, "rebuild the decoder for a different batch size"
        # NCHW -> (C, N*H*W): channels on sublanes, batch*space on lanes
        xs = [jnp.transpose(x, (1, 0, 2, 3)).reshape(x.shape[1],
                                                     n * x.shape[2] * x.shape[3])
              for x in inputs_nchw]
        args = xs + u_ops + [pack_params(params)]
        out = pl.pallas_call(
            kernel,
            out_shape=jax.ShapeDtypeStruct((out_c, out_l), jnp.float32),
            in_specs=[pl.BlockSpec(memory_space=pltpu.MemorySpace.VMEM)] * len(args),
            out_specs=pl.BlockSpec(memory_space=pltpu.MemorySpace.VMEM),
            scratch_shapes=[pltpu.VMEM((max_k, max_l), jnp.float32)],
            compiler_params=pltpu.CompilerParams(vmem_limit_bytes=32 * 1024 * 1024),
            cost_estimate=cost,
        )(*args)
        # (12, N*HW) -> (N, 12, H, W): layout fix-up in the wrapper
        return jnp.transpose(out.reshape(out_c, n, base_hw, base_hw), (1, 0, 2, 3))

    return forward


# ------------------------------------ parameters -------------------------------------------

def init_params(max_dim, min_dim, key):
    depths = int(round(math.log2(max_dim / min_dim)))
    params = []
    for j in range(depths):
        blocks = []
        for i in range(j, depths):
            dim = max_dim // (2 ** i)
            key, k1, k2 = jax.random.split(key, 3)
            blocks.append(dict(
                w=jax.random.normal(k1, (3, 3, dim, dim // 2), jnp.float32) * 0.1,  # HWIO
                b=jax.random.normal(k2, (dim // 2,), jnp.float32) * 0.01,
                gamma=jnp.ones((dim // 2,), jnp.float32),
                beta=jnp.zeros((dim // 2,), jnp.float32),
            ))
        params.append(blocks)
    return params


# --------------------------------- pure-JAX reference --------------------------------------

def reference_forward(inputs, params, max_dim, min_dim):
    depths = int(round(math.log2(max_dim / min_dim)))
    hp = jax.lax.Precision.HIGHEST
    outs = []
    for j in range(depths):
        x = inputs[j]
        for prm in params[j]:
            n, c, h, w = x.shape
            per = jnp.asarray(_upsample_op(h))
            up = jnp.einsum("ncp,pq->ncq", x.reshape(n, c, h * w), per,
                            precision=hp).reshape(n, c, 2 * h, 2 * w)
            y = jax.lax.conv_general_dilated(
                up, prm["w"], window_strides=(1, 1), padding=((1, 1), (1, 1)),
                dimension_numbers=("NCHW", "HWIO", "NCHW"), precision=hp)
            y = y + prm["b"][None, :, None, None]
            mean = jnp.mean(y, axis=(0, 2, 3), keepdims=True)
            var = jnp.mean((y - mean) ** 2, axis=(0, 2, 3), keepdims=True)
            y = ((y - mean) * jax.lax.rsqrt(var + 1e-5)
                 * prm["gamma"][None, :, None, None] + prm["beta"][None, :, None, None])
            x = 0.5 * y * (1.0 + jax.lax.erf(y * 0.7071067811865476))
        outs.append(x)
    outs.append(inputs[-1])
    return jnp.concatenate(outs, axis=1)


# --------------------------------------- main ----------------------------------------------

if __name__ == "__main__":
    max_dim, min_dim = 16, 4
    depths = int(round(math.log2(max_dim / min_dim)))   # 2
    N, base_hw = 2, 16

    key = jax.random.PRNGKey(0)
    keys = jax.random.split(key, depths + 2)
    params = init_params(max_dim, min_dim, keys[-1])

    inputs = []
    for i in range(depths):
        dim = max_dim // (2 ** i)
        hw = base_hw // (2 ** (depths - i))
        inputs.append(jax.random.normal(keys[i], (N, dim, hw, hw), jnp.float32))
    inputs.append(jax.random.normal(keys[depths], (N, min_dim, base_hw, base_hw), jnp.float32))

    forward = jax.jit(build_multi_decoder(max_dim, min_dim, base_hw, N))
    out = jax.block_until_ready(forward(inputs, params))
    assert out.shape == (N, min_dim * (depths + 1), base_hw, base_hw), out.shape

    ref = reference_forward(inputs, params, max_dim, min_dim)
    np.testing.assert_allclose(np.asarray(out), np.asarray(ref), rtol=2e-2, atol=2e-2)
    print("KERNEL_OK")
</pallas_src>

<mosaic_0001>
module attributes {stable_mosaic.version = 11 : i64} {
  func.func @k(%arg0: memref<8x128xf32, #tpu.memory_space<vmem>>, %arg1: memref<8x128xf32, #tpu.memory_space<vmem>>) attributes {dimension_semantics = [], scalar_prefetch = 0 : i64, scratch_operands = 0 : i64, tpu.core_type = #tpu.core_type<tc>} {
    %c0 = arith.constant 0 : index
    %c0_0 = arith.constant 0 : index
    %0 = vector.load %arg0[%c0, %c0_0] : memref<8x128xf32, #tpu.memory_space<vmem>>, vector<8x128xf32>
    %c1_i32 = arith.constant 1 : i32
    %1 = tpu.dynamic_rotate %0 by %c1_i32 dim 1 : vector<8x128xf32>, i32 -> vector<8x128xf32>
    %c0_1 = arith.constant 0 : index
    %c0_2 = arith.constant 0 : index
    %2 = vector.load %arg1[%c0_1, %c0_2] : memref<8x128xf32, #tpu.memory_space<vmem>>, vector<8x128xf32>
    tpu.vector_store %arg1[%c0_1, %c0_2], %1 {strides = array<i32>} : memref<8x128xf32, #tpu.memory_space<vmem>>, vector<8x128xf32>,
    return
  }
}

</mosaic_0001>

<llo_original>
// kernel: tpu_custom_call.1
$region0: #{tpu_custom_call.1}
  #allocation0 [shape = 'u32[]', space=smem, size = 0x4, offset = 0x4, fixed_abs, tag = 'smem constant byte address 0x4 - core index']
  #allocation1 [shape = 'u32[144,128]{1,0:T(1,128)}', space=vmem, size = 0x12000, scoped, tag = 'internal scratch']
  %s0 = inlined_call_operand.hbm [shape: f32[8,128], index: 0, kind: input, shape index: {}]
  %s1 = inlined_call_operand.hbm [shape: f32[8,128], index: 1, kind: output, shape index: {}]
  %s2 = sld [smem:[#allocation0]]
  $region18: #{tpu_custom_call.1} parent=0
    _
  %s4 = ssub.s32 1, %s2
  %s5 = scalar_select 0, %s4, %s2
  $region1: #{tpu_custom_call.1} parent=0
    #allocation2 [shape = 'u8[4096]{0}', space=vmem, size = 0x1000, scoped, tag = 'input window, operand 0, single buffered']
    #allocation3 [shape = 's32[1]{0}', space=sflag, size = 0x4, scoped, tag = 'scoped memory for tpu_custom_call.1']
    #allocation4 [shape = 's32[1]{0}', space=sflag, size = 0x4, scoped, tag = 'scoped memory for tpu_custom_call.1']
    #allocation5 [shape = 'u8[4096]{0}', space=vmem, size = 0x1000, scoped, tag = 'output window, operand 0, single buffered']
    %6 = vsyncpa [#allocation3], 0
    %7 = vsyncpa [#allocation4], 0
    // Predicated region
    $region2: #{tpu_custom_call.1} parent=1 // pred_check
      _
    $region3: #{tpu_custom_call.1} parent=1 // pred_check_branch
      %9 = sbr.rel (0) target = $region5
    $region4: #{tpu_custom_call.1} parent=1 // pred_region
      %s11 = ssub.s32 128, 128
      %12 = vsyncadd [#allocation3], %s11
      %s14 = sshll.u32 [#allocation2], 4
      %s15 = int_to_ptr.vmem [resolvable:$true] %s14
      %17 = dma.hbm_to_vmem [thread:$0]  %s0, 128, %s15, [#allocation3]
    $region5: #{tpu_custom_call.1} parent=1 // pred_fallthru
      _
    // Predicated region
    $region6: #{tpu_custom_call.1} parent=1 // pred_check
      _
    $region7: #{tpu_custom_call.1} parent=1 // pred_check_branch
      %19 = sbr.rel (0) target = $region9
    $region8: #{tpu_custom_call.1} parent=1 // pred_region
      %20 = dma.done [#allocation3], 128
    $region9: #{tpu_custom_call.1} parent=1 // pred_fallthru
      _
    %v21 = vld [vmem:[#allocation2] sm:$0xff]
    %22 = vrot.lane.b32.xlu0 %v21, 1
    %v23 = vpop.permute.xlu0 %22
    %24 = vst [vmem:[#allocation5] sm:$0xff] %v23
    // Predicated region
    $region10: #{tpu_custom_call.1} parent=1 // pred_check
      _
    $region11: #{tpu_custom_call.1} parent=1 // pred_check_branch
      %26 = sbr.rel (0) target = $region13
    $region12: #{tpu_custom_call.1} parent=1 // pred_region
      %s28 = ssub.s32 128, 128
      %29 = vsyncadd [#allocation4], %s28
      %s31 = sshll.u32 [#allocation5], 4
      %s32 = int_to_ptr.vmem [resolvable:$true] %s31
      %34 = dma.vmem_to_hbm [thread:$0]  %s32, 128, %s1, [#allocation4]
    $region13: #{tpu_custom_call.1} parent=1 // pred_fallthru
      _
    // Predicated region
    $region14: #{tpu_custom_call.1} parent=1 // pred_check
      _
    $region15: #{tpu_custom_call.1} parent=1 // pred_check_branch
      %36 = sbr.rel (0) target = $region17
    $region16: #{tpu_custom_call.1} parent=1 // pred_region
      %37 = dma.done [#allocation4], 128
    $region17: #{tpu_custom_call.1} parent=1 // pred_fallthru
      _
    %38 = vsyncpa [#allocation3], 1
    %39 = vsyncpa [#allocation4], 1

</llo_original>
